<compile_context>
chip_gen: v7x
topology: tpu7x:2x2x1
jax: 0.10.0
libtpu: 0.0.40
codegen_flags: <defaults>
</compile_context>

<pallas_src>
import jax
import jax.numpy as jnp
import numpy as np
from jax.experimental import pallas as pl
from jax.experimental.pallas import tpu as pltpu


_SMALL_BYTES = 1 << 20          # <= 1 MiB total: run as a single block
_TARGET_TILE_BYTES = 2 << 20    # ~2 MiB per block per operand
_LANE = 128
_SUBLANE = 8


def _identity_kernel(x_ref, o_ref):
    # Straight copy of the current VMEM tile (written back into the aliased
    # input buffer, byte-for-byte identical values).
    o_ref[...] = x_ref[...]


def _choose_2d_view(shape):
    """Pick a lane-dense (rows, cols) factorization of the flat element count."""
    total = 1
    for d in shape:
        total *= d

    # Already lane-dense along the natural last dim: keep it (no relayout).
    if len(shape) >= 2 and shape[-1] % _LANE == 0:
        return total // shape[-1], shape[-1]

    # Otherwise re-factor so the last dim is a large multiple of 128
    # (full-width stores are the biggest measured single lever).
    for cols in (4096, 2048, 1024, 512, 256, 128):
        if total % cols == 0:
            return total // cols, cols

    # Fall back to the natural last dim (accept masked partial stores).
    if len(shape) >= 1 and shape[-1] > 0:
        return total // shape[-1], shape[-1]
    return 1, total


def _choose_block(rows, cols, itemsize):
    """Byte-budgeted block shape + grid."""
    total_bytes = rows * cols * itemsize

    # Small-input fast path: one block, one grid step.
    if total_bytes <= _SMALL_BYTES:
        return rows, cols, (1, 1)

    # Tile cols only when even a minimal 8-row slab of the full width would
    # blow the per-block budget (keeps the kernel shape-robust for huge
    # trailing dims); needs 128-aligned cols for a legal block shape.
    if cols % _LANE == 0 and _SUBLANE * cols * itemsize > _TARGET_TILE_BYTES:
        tile_cols = (_TARGET_TILE_BYTES // (_SUBLANE * itemsize)) // _LANE * _LANE
        tile_cols = max(_LANE, min(tile_cols, cols))
    else:
        tile_cols = cols

    tile_rows = _TARGET_TILE_BYTES // (tile_cols * itemsize)
    tile_rows = max(_SUBLANE, (tile_rows // _SUBLANE) * _SUBLANE)
    tile_rows = min(tile_rows, rows)
    if tile_rows < rows:
        # Blocks smaller than the array must obey the (8, 128) rule.
        tile_rows = max(_SUBLANE, (tile_rows // _SUBLANE) * _SUBLANE)

    grid = (pl.cdiv(rows, tile_rows), pl.cdiv(cols, tile_cols))
    return tile_rows, tile_cols, grid


@jax.jit
def identity(x: jax.Array) -> jax.Array:
    """Identity forward pass (y = x) implemented as a Pallas TPU kernel."""
    orig_shape = x.shape

    if x.size == 0:
        # Nothing to copy; a zero-size grid is pointless.
        return x

    rows, cols = _choose_2d_view(orig_shape)
    x2 = x.reshape(rows, cols)

    tile_rows, tile_cols, grid = _choose_block(rows, cols, x2.dtype.itemsize)

    out2 = pl.pallas_call(
        _identity_kernel,
        out_shape=jax.ShapeDtypeStruct((rows, cols), x2.dtype),
        grid=grid,
        in_specs=[pl.BlockSpec((tile_rows, tile_cols), lambda i, j: (i, j))],
        out_specs=pl.BlockSpec((tile_rows, tile_cols), lambda i, j: (i, j)),
        # Output aliases the input buffer: no extra HBM allocation; writeback
        # is in place and values are unchanged.
        input_output_aliases={0: 0},
        compiler_params=pltpu.CompilerParams(
            dimension_semantics=("parallel", "parallel"),
        ),
    )(x2)

    return out2.reshape(orig_shape)


if __name__ == "__main__":
    key = jax.random.PRNGKey(0)
    # NCHW input, small shapes: batch=2, channels=4, spatial=16x16.
    x = jax.random.normal(key, (2, 4, 16, 16), dtype=jnp.float32)
    # Host copy for comparison (the pallas output aliases/donates its input).
    x_host = np.asarray(jax.device_get(x))

    y = identity(x)
    y = jax.block_until_ready(y)

    assert y.shape == x_host.shape, (y.shape, x_host.shape)
    assert y.dtype == x_host.dtype, (y.dtype, x_host.dtype)
    assert np.array_equal(np.asarray(jax.device_get(y)), x_host), "Identity output mismatch"

    print("KERNEL_OK")
</pallas_src>

<mosaic_0001>
module attributes {stable_mosaic.version = 11 : i64} {
  func.func @_identity_kernel(%arg0: i32, %arg1: i32, %arg2: memref<1x2048xf32, #tpu.memory_space<vmem>>, %arg3: memref<1x2048xf32, #tpu.memory_space<vmem>>) attributes {dimension_semantics = [#tpu.dimension_semantics<parallel>, #tpu.dimension_semantics<parallel>], iteration_bounds = array<i64: 1, 1>, scalar_prefetch = 0 : i64, scratch_operands = 0 : i64, tpu.core_type = #tpu.core_type<tc>, window_params = [{transform_indices = @transform_0, window_bounds = array<i64: 1, 2048>}, {transform_indices = @transform_1, window_bounds = array<i64: 1, 2048>}]} {
    %c0 = arith.constant 0 : index
    %c0_0 = arith.constant 0 : index
    %0 = vector.load %arg2[%c0, %c0_0] : memref<1x2048xf32, #tpu.memory_space<vmem>>, vector<1x2048xf32>
    %c0_1 = arith.constant 0 : index
    %c0_2 = arith.constant 0 : index
    %1 = vector.load %arg3[%c0_1, %c0_2] : memref<1x2048xf32, #tpu.memory_space<vmem>>, vector<1x2048xf32>
    tpu.vector_store %arg3[%c0_1, %c0_2], %0 {strides = array<i32>} : memref<1x2048xf32, #tpu.memory_space<vmem>>, vector<1x2048xf32>,
    return
  }
  func.func @transform_0(%arg0: i32, %arg1: i32) -> (i32, i32) {
    %c0_i32 = arith.constant 0 : i32
    return %arg0, %arg1 : i32, i32
  }
  func.func @transform_1(%arg0: i32, %arg1: i32) -> (i32, i32) {
    %c0_i32 = arith.constant 0 : i32
    return %arg0, %arg1 : i32, i32
  }
}

</mosaic_0001>

<llo_original>
// kernel: identity.1
$region0: #{identity.1}
  #allocation0 [shape = 'u32[]', space=smem, size = 0x4, offset = 0x4, fixed_abs, tag = 'smem constant byte address 0x4 - core index']
  #allocation1 [shape = 'u32[144,128]{1,0:T(1,128)}', space=vmem, size = 0x12000, scoped, tag = 'internal scratch']
  %s0 = inlined_call_operand.vmem [shape: f32[1,2048], index: 0, kind: input, shape index: {}, may-alias: {0,1}]
  %s1 = inlined_call_operand.vmem [shape: f32[1,2048], index: 1, kind: output, shape index: {}, may-alias: {0,1}]
  %s2 = sld [smem:[#allocation0]]
  $region14: #{identity.1} parent=0
    _
  %s4 = ssub.s32 1, %s2
  %s5 = scalar_select 0, %s4, %s2
  // Predicated region
  $region2: #{identity.1} parent=0 // pred_check
    _
  $region3: #{identity.1} parent=0 // pred_check_branch
    %7 = sbr.rel (0) target = $region5
  $region4: #{identity.1} parent=0 // pred_region
    _
  $region5: #{identity.1} parent=0 // pred_fallthru
    _
  %v8 = vld [vmem:[%s0] sm:$0xff]
  %v9 = vld [vmem:[%s0 + $0x8] sm:$0xff]
  %10 = vst [vmem:[%s1] sm:$0xff] %v8
  %11 = vst [vmem:[%s1 + $0x8] sm:$0xff] %v9
  // Predicated region
  $region6: #{identity.1} parent=0 // pred_check
    _
  $region7: #{identity.1} parent=0 // pred_check_branch
    %13 = sbr.rel (0) target = $region9
  $region8: #{identity.1} parent=0 // pred_region
    _
  $region9: #{identity.1} parent=0 // pred_fallthru
    _
  // Predicated region
  $region10: #{identity.1} parent=0 // pred_check
    _
  $region11: #{identity.1} parent=0 // pred_check_branch
    %15 = sbr.rel (0) target = $region13
  $region12: #{identity.1} parent=0 // pred_region
    _
  $region13: #{identity.1} parent=0 // pred_fallthru
    _

</llo_original>
